<compile_context>
chip_gen: v7x
topology: tpu7x:2x2x1
jax: 0.10.0
libtpu: 0.0.40
codegen_flags: <defaults>
</compile_context>

<pallas_src>
import functools

import jax
import jax.numpy as jnp
from jax.experimental import pallas as pl
from jax.experimental.pallas import tpu as pltpu

_LANE = 128              # lane tile width
_SUB = 8                 # sublane tile height (resident accumulator rows)
_MAX_BLOCK_ROWS = 4096   # 2 MiB f32 per input per buffer (8 MiB double-buffered)
_SMALL_ROWS = 128        # at or below this, use a single full-array block
_PAD_SENTINEL = -30.0    # (x=-30, t=0): pt rounds to exactly 1.0 in f32 -> focal term == 0
_VMEM_LIMIT = 48 * 1024 * 1024  # headroom for big tiles + elementwise temporaries


def _round_up(a, m):
    return ((a + m - 1) // m) * m


def _focal_kernel(x_ref, t_ref, out_ref, *, alpha, gamma, gamma_int,
                  hard_targets, kb, block_rows, valid_rows):
    """One (block_rows, 128) tile: stable BCE-with-logits, focal weight, partial sum."""
    c = pl.program_id(0)   # megacore split ("parallel")
    k = pl.program_id(1)   # reduction axis ("arbitrary")

    @pl.when(k == 0)
    def _():
        out_ref[...] = jnp.zeros_like(out_ref)

    x = x_ref[...].astype(jnp.float32)
    t = t_ref[...].astype(jnp.float32)

    # Ragged-tail mask: the grid may overshoot the array's rows (partial last
    # block and clamped duplicate blocks), and out-of-bounds lanes hold stale
    # garbage that could be NaN/Inf.  Mask the *inputs* before any exp/log so
    # garbage never reaches a transcendental; the sentinel pair (x=-30, t=0)
    # contributes exactly 0 to the focal sum in f32.
    row0 = (c * kb + k) * block_rows                         # unclamped block origin
    row = jax.lax.broadcasted_iota(jnp.int32, x.shape, 0)
    valid = (row0 + row) < valid_rows
    x = jnp.where(valid, x, jnp.float32(_PAD_SENTINEL))
    t = jnp.where(valid, t, jnp.float32(0.0))

    # Numerically stable BCEWithLogitsLoss(reduction='none'):
    #   bce = max(x, 0) - x*t + log1p(exp(-|x|))
    e = jnp.exp(-jnp.abs(x))
    mx = jnp.maximum(x, 0.0)
    xt = x * t
    bce = mx - xt + jnp.log1p(e)

    if hard_targets:
        # 2 transcendentals/element; exact only for t in {0, 1}.
        same_side = (x >= 0.0) == (t > 0.5)
        pt = jnp.where(same_side, jnp.float32(1.0), e) / (1.0 + e)
    else:
        # Soft-target safe: pt = exp(-bce) == exp(xt - mx) / (1 + e).
        # Reuses e and breaks the serial exp -> log -> exp EUP chain.
        pt = jnp.exp(xt - mx) / (1.0 + e)
    w = 1.0 - pt   # >= 0 since bce >= 0

    # Integer-gamma fast path: repeated multiply instead of pow = exp(g*log(w)).
    if gamma_int is not None:
        if gamma_int == 0:
            wg = jnp.ones_like(w)
        else:
            wg = w
            for _ in range(gamma_int - 1):
                wg = wg * w
    else:
        wg = w ** jnp.float32(gamma)

    f = alpha * wg * bce

    # Fold block_rows down to the resident (8, 128) output with VPU adds only;
    # the single cross-lane/sublane reduce happens once in the wrapper.
    # TODO(synk): for n >~ 1e8 elements, two-level accumulation would bound
    # running-sum drift tighter than a single running f32 sum per slot.
    br = f.shape[0]
    out_ref[...] += f.reshape(br // _SUB, _SUB, _LANE).sum(axis=0)


def focal_loss(inputs, targets, alpha=0.9, gamma=2, hard_targets=False):
    """Matches FocalLoss(alpha, gamma).forward(inputs, targets)."""
    assert inputs.shape == targets.shape
    n = int(inputs.size)

    # alpha / gamma are static Python numbers (nn.Module attributes).
    alpha_f = float(alpha)
    gamma_f = float(gamma)
    gamma_int = int(gamma_f) if (gamma_f == int(gamma_f) and 0 <= gamma_f <= 8) else None

    # Free reshape; keep native dtype (cast happens in-kernel, so bf16/int8
    # callers get halved/quartered HBM traffic on this mem-bound kernel).
    x = inputs.reshape(-1)
    t = targets.reshape(-1)

    rows = pl.cdiv(n, _LANE)

    if rows <= _SMALL_ROWS:
        # Tiny input: one full-array block, no megacore split.
        rows_p = max(_round_up(rows, _SUB), _SUB)
        block_rows = rows_p
        num_parallel, kb = 1, 1
    else:
        rows_p = rows   # no row padding; ragged last block is masked in-kernel
        # Pick the tile BEFORE the megacore split so total_blocks >= ~4 and a
        # v7x megacore always gets >= 2 blocks per TensorCore.  Multiple of 32
        # keeps packed (16/32, 128) min tiles legal for sub-32-bit inputs.
        block_rows = min(_MAX_BLOCK_ROWS, _round_up(pl.cdiv(rows, 4), 32))
        total_blocks = pl.cdiv(rows, block_rows)
        num_parallel = 2 if total_blocks >= 2 else 1
        kb = pl.cdiv(total_blocks, num_parallel)

    # Only the sub-128 lane remainder (plus <8 sentinel rows on the tiny path)
    # is padded; the previous version's full block-granularity pad (an extra
    # HBM round trip of both inputs) is gone.
    padded_n = rows_p * _LANE
    pad = padded_n - n
    if pad:
        x = jnp.pad(x, (0, pad), constant_values=_PAD_SENTINEL)
        t = jnp.pad(t, (0, pad), constant_values=0.0)

    x2 = x.reshape(rows_p, _LANE)
    t2 = t.reshape(rows_p, _LANE)

    # The grid may cover more blocks than exist (uneven megacore split): clamp
    # the block index so the DMA stays in bounds.  The in-kernel row mask uses
    # the *unclamped* index, so duplicate blocks contribute exactly 0.
    last_block = pl.cdiv(rows_p, block_rows) - 1

    def in_map(c, k):
        return (jnp.minimum(c * kb + k, last_block), 0)

    in_spec = pl.BlockSpec((block_rows, _LANE), in_map)

    kernel = functools.partial(
        _focal_kernel, alpha=alpha_f, gamma=gamma_f, gamma_int=gamma_int,
        hard_targets=bool(hard_targets), kb=kb, block_rows=block_rows,
        valid_rows=rows_p)

    partial_sums = pl.pallas_call(
        kernel,
        out_shape=jax.ShapeDtypeStruct((num_parallel * _SUB, _LANE), jnp.float32),
        grid_spec=pltpu.PrefetchScalarGridSpec(
            num_scalar_prefetch=0,
            grid=(num_parallel, kb),
            in_specs=[in_spec, in_spec],
            out_specs=pl.BlockSpec((_SUB, _LANE), lambda c, k: (c, 0)),
        ),
        compiler_params=pltpu.CompilerParams(
            dimension_semantics=("parallel", "arbitrary"),
            vmem_limit_bytes=_VMEM_LIMIT),
    )(x2, t2)

    # Single final cross-lane/sublane reduce of the partial sums, then mean.
    return partial_sums.sum() / jnp.float32(n)


def _focal_loss_ref(inputs, targets, alpha=0.9, gamma=2):
    x = inputs.astype(jnp.float32)
    t = targets.astype(jnp.float32)
    bce = jnp.maximum(x, 0.0) - x * t + jnp.log1p(jnp.exp(-jnp.abs(x)))
    pt = jnp.exp(-bce)
    return jnp.mean(alpha * (1.0 - pt) ** gamma * bce)


if __name__ == "__main__":
    key = jax.random.PRNGKey(0)
    k1, k2, k3, k4 = jax.random.split(key, 4)

    # Primary check: small segmentation-style logit map (N, C, H, W).
    shape = (2, 4, 16, 16)
    inputs = jax.random.normal(k1, shape, dtype=jnp.float32)             # logits
    targets = (jax.random.uniform(k2, shape) > 0.5).astype(jnp.float32)  # {0,1}

    out = focal_loss(inputs, targets, alpha=0.9, gamma=2)
    out = jax.block_until_ready(out)
    ref = _focal_loss_ref(inputs, targets, alpha=0.9, gamma=2)
    assert jnp.allclose(out, ref, atol=1e-5, rtol=1e-5), (out, ref)

    # Secondary check (still small): ragged element count exercising the
    # multi-block masked-tail + megacore-split path and the hard-target
    # 2-transcendental variant.
    shape2 = (3, 7, 37, 23)   # 17871 elements -> 140 rows of 128 (+49 remainder)
    inputs2 = jax.random.normal(k3, shape2, dtype=jnp.float32)
    targets2 = (jax.random.uniform(k4, shape2) > 0.5).astype(jnp.float32)

    out2 = focal_loss(inputs2, targets2, alpha=0.9, gamma=2, hard_targets=True)
    out2 = jax.block_until_ready(out2)
    ref2 = _focal_loss_ref(inputs2, targets2, alpha=0.9, gamma=2)
    assert jnp.allclose(out2, ref2, atol=1e-5, rtol=1e-5), (out2, ref2)

    print("KERNEL_OK")
</pallas_src>

<mosaic_0001>
module attributes {stable_mosaic.version = 11 : i64} {
  func.func @_focal_kernel(%arg0: i32, %arg1: i32, %arg2: memref<16x128xf32, #tpu.memory_space<vmem>>, %arg3: memref<16x128xf32, #tpu.memory_space<vmem>>, %arg4: memref<8x128xf32, #tpu.memory_space<vmem>>) attributes {dimension_semantics = [#tpu.dimension_semantics<parallel>, #tpu.dimension_semantics<arbitrary>], iteration_bounds = array<i64: 1, 1>, scalar_prefetch = 0 : i64, scratch_operands = 0 : i64, tpu.core_type = #tpu.core_type<tc>, window_params = [{transform_indices = @transform_0, window_bounds = array<i64: 16, 128>}, {transform_indices = @transform_1, window_bounds = array<i64: 16, 128>}, {transform_indices = @transform_2, window_bounds = array<i64: 8, 128>}]} {
    %c0_i32 = arith.constant 0 : i32
    %0 = arith.cmpi eq, %arg1, %c0_i32 : i32
    %1 = arith.extui %0 : i1 to i32
    %c0_i32_0 = arith.constant 0 : i32
    %2 = arith.cmpi ne, %1, %c0_i32_0 : i32
    scf.if %2 {
      %cst_16 = arith.constant 0.000000e+00 : f32
      %43 = vector.broadcast %cst_16 : f32 to vector<8x128xf32>
      %c0_17 = arith.constant 0 : index
      %c0_18 = arith.constant 0 : index
      %44 = vector.load %arg4[%c0_17, %c0_18] : memref<8x128xf32, #tpu.memory_space<vmem>>, vector<8x128xf32>
      tpu.vector_store %arg4[%c0_17, %c0_18], %43 {strides = array<i32>} : memref<8x128xf32, #tpu.memory_space<vmem>>, vector<8x128xf32>,
    } else {
    }
    %c0 = arith.constant 0 : index
    %c0_1 = arith.constant 0 : index
    %3 = vector.load %arg2[%c0, %c0_1] : memref<16x128xf32, #tpu.memory_space<vmem>>, vector<16x128xf32>
    %c0_2 = arith.constant 0 : index
    %c0_3 = arith.constant 0 : index
    %4 = vector.load %arg3[%c0_2, %c0_3] : memref<16x128xf32, #tpu.memory_space<vmem>>, vector<16x128xf32>
    %c1_i32 = arith.constant 1 : i32
    %5 = arith.muli %arg0, %c1_i32 : i32
    %6 = arith.addi %5, %arg1 : i32
    %c16_i32 = arith.constant 16 : i32
    %7 = arith.muli %6, %c16_i32 : i32
    %8 = tpu.iota {dimensions = array<i32: 0>} : vector<16x128xi32>
    %9 = vector.broadcast %7 : i32 to vector<16x128xi32>
    %10 = arith.addi %9, %8 : vector<16x128xi32>
    %c16_i32_4 = arith.constant 16 : i32
    %11 = vector.broadcast %c16_i32_4 : i32 to vector<16x128xi32>
    %12 = arith.cmpi slt, %10, %11 : vector<16x128xi32>
    %cst = arith.constant -3.000000e+01 : f32
    %13 = vector.broadcast %cst : f32 to vector<16x128xf32>
    %14 = arith.select %12, %3, %13 : vector<16x128xi1>, vector<16x128xf32>
    %cst_5 = arith.constant 0.000000e+00 : f32
    %15 = vector.broadcast %cst_5 : f32 to vector<16x128xf32>
    %16 = arith.select %12, %4, %15 : vector<16x128xi1>, vector<16x128xf32>
    %17 = math.absf %14 : vector<16x128xf32>
    %cst_6 = arith.constant 0.000000e+00 : f32
    %18 = vector.broadcast %cst_6 : f32 to vector<16x128xf32>
    %19 = arith.subf %18, %17 : vector<16x128xf32>
    %20 = math.exp %19 : vector<16x128xf32>
    %cst_7 = arith.constant 0.000000e+00 : f32
    %21 = vector.broadcast %cst_7 : f32 to vector<16x128xf32>
    %22 = arith.maximumf %14, %21 : vector<16x128xf32>
    %23 = arith.mulf %14, %16 : vector<16x128xf32>
    %24 = arith.subf %22, %23 : vector<16x128xf32>
    %25 = math.log1p %20 : vector<16x128xf32>
    %26 = arith.addf %24, %25 : vector<16x128xf32>
    %27 = arith.subf %23, %22 : vector<16x128xf32>
    %28 = math.exp %27 : vector<16x128xf32>
    %cst_8 = arith.constant 1.000000e+00 : f32
    %29 = vector.broadcast %cst_8 : f32 to vector<16x128xf32>
    %30 = arith.addf %29, %20 : vector<16x128xf32>
    %31 = arith.divf %28, %30 : vector<16x128xf32>
    %cst_9 = arith.constant 1.000000e+00 : f32
    %32 = vector.broadcast %cst_9 : f32 to vector<16x128xf32>
    %33 = arith.subf %32, %31 : vector<16x128xf32>
    %34 = arith.mulf %33, %33 : vector<16x128xf32>
    %cst_10 = arith.constant 0.899999976 : f32
    %35 = vector.broadcast %cst_10 : f32 to vector<16x128xf32>
    %36 = arith.mulf %35, %34 : vector<16x128xf32>
    %37 = arith.mulf %36, %26 : vector<16x128xf32>
    %c0_11 = arith.constant 0 : index
    %c0_12 = arith.constant 0 : index
    %38 = vector.load %arg4[%c0_11, %c0_12] : memref<8x128xf32, #tpu.memory_space<vmem>>, vector<8x128xf32>
    %39 = vector.shape_cast %37 : vector<16x128xf32> to vector<2x8x128xf32>
    %cst_13 = arith.constant dense<0.000000e+00> : vector<8x128xf32>
    %40 = vector.multi_reduction <add>, %39, %cst_13 [0] : vector<2x8x128xf32> to vector<8x128xf32>
    %41 = arith.addf %38, %40 : vector<8x128xf32>
    %c0_14 = arith.constant 0 : index
    %c0_15 = arith.constant 0 : index
    %42 = vector.load %arg4[%c0_14, %c0_15] : memref<8x128xf32, #tpu.memory_space<vmem>>, vector<8x128xf32>
    tpu.vector_store %arg4[%c0_14, %c0_15], %41 {strides = array<i32>} : memref<8x128xf32, #tpu.memory_space<vmem>>, vector<8x128xf32>,
    return
  }
  func.func @transform_0(%arg0: i32, %arg1: i32) -> (i32, i32) {
    %c1_i32 = arith.constant 1 : i32
    %0 = arith.muli %arg0, %c1_i32 : i32
    %1 = arith.addi %0, %arg1 : i32
    %c0_i32 = arith.constant 0 : i32
    %2 = arith.minsi %1, %c0_i32 : i32
    %c0_i32_0 = arith.constant 0 : i32
    %c0_i32_1 = arith.constant 0 : i32
    return %2, %c0_i32_0 : i32, i32
  }
  func.func @transform_1(%arg0: i32, %arg1: i32) -> (i32, i32) {
    %c1_i32 = arith.constant 1 : i32
    %0 = arith.muli %arg0, %c1_i32 : i32
    %1 = arith.addi %0, %arg1 : i32
    %c0_i32 = arith.constant 0 : i32
    %2 = arith.minsi %1, %c0_i32 : i32
    %c0_i32_0 = arith.constant 0 : i32
    %c0_i32_1 = arith.constant 0 : i32
    return %2, %c0_i32_0 : i32, i32
  }
  func.func @transform_2(%arg0: i32, %arg1: i32) -> (i32, i32) {
    %c0_i32 = arith.constant 0 : i32
    %c0_i32_0 = arith.constant 0 : i32
    return %arg0, %c0_i32 : i32, i32
  }
}

</mosaic_0001>

<llo_original>
// kernel: tpu_custom_call.1
$region0: #{tpu_custom_call.1}
  #allocation0 [shape = 'u32[]', space=smem, size = 0x4, offset = 0x4, fixed_abs, tag = 'smem constant byte address 0x4 - core index']
  #allocation1 [shape = 'u32[144,128]{1,0:T(1,128)}', space=vmem, size = 0x12000, scoped, tag = 'internal scratch']
  %s0 = inlined_call_operand.hbm [shape: f32[16,128], index: 0, kind: input, shape index: {}]
  %s1 = inlined_call_operand.hbm [shape: f32[16,128], index: 1, kind: input, shape index: {}]
  %s2 = inlined_call_operand.hbm [shape: f32[8,128], index: 2, kind: output, shape index: {}]
  %s3 = sld [smem:[#allocation0]]
  $region30: #{tpu_custom_call.1} parent=0
    _
  %s5 = ssub.s32 1, %s3
  %s6 = scalar_select 0, %s5, %s3
  $region1: #{tpu_custom_call.1} parent=0
    #allocation2 [shape = 'u8[8192]{0}', space=vmem, size = 0x2000, scoped, tag = 'input window, operand 0, single buffered']
    #allocation3 [shape = 's32[1]{0}', space=sflag, size = 0x4, scoped, tag = 'scoped memory for tpu_custom_call.1']
    #allocation4 [shape = 's32[1]{0}', space=sflag, size = 0x4, scoped, tag = 'scoped memory for tpu_custom_call.1']
    #allocation5 [shape = 'u8[8192]{0}', space=vmem, size = 0x2000, scoped, tag = 'input window, operand 1, single buffered']
    #allocation6 [shape = 's32[1]{0}', space=sflag, size = 0x4, scoped, tag = 'scoped memory for tpu_custom_call.1']
    #allocation7 [shape = 'u8[4096]{0}', space=vmem, size = 0x1000, scoped, tag = 'output window, operand 0, single buffered']
    %7 = vsyncpa [#allocation3], 0
    %8 = vsyncpa [#allocation6], 0
    %9 = vsyncpa [#allocation4], 0
    // Predicated region
    $region2: #{tpu_custom_call.1} parent=1 // pred_check
      _
    $region3: #{tpu_custom_call.1} parent=1 // pred_check_branch
      %11 = sbr.rel (0) target = $region5
    $region4: #{tpu_custom_call.1} parent=1 // pred_region
      %s12 = sadd.s32 0, 0
      %p13 = scmp.lt.s32.totalorder %s12, 0
      %s14 = scalar_select %p13, %s12, 0
      %s15 = smul.u32 2, %s14
      %s17 = ssub.s32 256, 256
      %18 = vsyncadd [#allocation3], %s17
      %s19 = smul.addr %s15, 128
      %s20 = scalar_lea.hbm %s0, %s19
      %s21 = sshll.u32 [#allocation2], 4
      %s22 = int_to_ptr.vmem [resolvable:$true] %s21
      %27 = dma.hbm_to_vmem [thread:$0]  %s20, 256, %s22, [#allocation3], 128, 128, 8
    $region5: #{tpu_custom_call.1} parent=1 // pred_fallthru
      _
    // Predicated region
    $region6: #{tpu_custom_call.1} parent=1 // pred_check
      _
    $region7: #{tpu_custom_call.1} parent=1 // pred_check_branch
      %29 = sbr.rel (0) target = $region9
    $region8: #{tpu_custom_call.1} parent=1 // pred_region
      %s30 = sadd.s32 0, 0
      %p31 = scmp.lt.s32.totalorder %s30, 0
      %s32 = scalar_select %p31, %s30, 0
      %s33 = smul.u32 2, %s32
      %s35 = ssub.s32 256, 256
      %36 = vsyncadd [#allocation6], %s35
      %s37 = smul.addr %s33, 128
      %s38 = scalar_lea.hbm %s1, %s37
      %s39 = sshll.u32 [#allocation5], 4
      %s40 = int_to_ptr.vmem [resolvable:$true] %s39
      %45 = dma.hbm_to_vmem [thread:$0]  %s38, 256, %s40, [#allocation6], 128, 128, 8
    $region9: #{tpu_custom_call.1} parent=1 // pred_fallthru
      _
    // Predicated region
    $region10: #{tpu_custom_call.1} parent=1 // pred_check
      _
    $region11: #{tpu_custom_call.1} parent=1 // pred_check_branch
      %47 = sbr.rel (0) target = $region13
    $region12: #{tpu_custom_call.1} parent=1 // pred_region
      %48 = dma.done [#allocation3], 256
    $region13: #{tpu_custom_call.1} parent=1 // pred_fallthru
      _
    // Predicated region
    $region14: #{tpu_custom_call.1} parent=1 // pred_check
      _
    $region15: #{tpu_custom_call.1} parent=1 // pred_check_branch
      %50 = sbr.rel (0) target = $region17
    $region16: #{tpu_custom_call.1} parent=1 // pred_region
      %51 = dma.done [#allocation6], 256
    $region17: #{tpu_custom_call.1} parent=1 // pred_fallthru
      _
    %s52 = sadd.s32 0, 0
    %p53 = scmp.lt.s32.totalorder %s52, 0
    %s54 = scalar_select %p53, %s52, 0
    %s55 = smul.u32 2, %s54
    %s56 = sadd.s32 0, 0
    %p57 = scmp.lt.s32.totalorder %s56, 0
    %s58 = scalar_select %p57, %s56, 0
    %s59 = smul.u32 2, %s58
    %p60 = scmp.eq.s32.totalorder 0, 0
    // Predicated region
    $region18: #{tpu_custom_call.1} parent=1 // pred_check
      %p61 = pneg %p60
    $region19: #{tpu_custom_call.1} parent=1 // pred_check_branch
      %63 = sbr.rel (%p61) target = $region21
    $region20: #{tpu_custom_call.1} parent=1 // pred_region
      %64 = vst [vmem:[#allocation7] sm:$0xff] 0.0
    $region21: #{tpu_custom_call.1} parent=1 // pred_fallthru
      _
    %v65 = vld [vmem:[#allocation2] sm:$0xff]
    %v66 = vld [vmem:[#allocation2 + $0x8] sm:$0xff]
    %v67 = vld [vmem:[#allocation5] sm:$0xff]
    %v68 = vld [vmem:[#allocation5 + $0x8] sm:$0xff]
    %s69 = sadd.s32 0, 0
    %s70 = smul.u32 %s69, 16
    %v71 = vlaneseq
    %v72 = vshrl.u32 %v71, 7
    %v73 = vadd.s32 %v72, 8
    %v74 = vstv %s70
    %v75 = vadd.s32 %v74, %v72
    %v76 = vadd.s32 %v74, %v73
    %vm77 = vcmp.lt.s32.totalorder %v75, 16
    %vm78 = vcmp.lt.s32.totalorder %v76, 16
    %v79 = vsel %vm77, %v65, -30.0
    %v80 = vsel %vm78, %v66, -30.0
    %v81 = vsel %vm77, %v67, 0.0
    %v82 = vsel %vm78, %v68, 0.0
    %v83 = vand.u32 2147483647, %v79
    %v84 = vand.u32 2147483647, %v80
    %v85 = vsub.f32 0.0, %v83
    %v86 = vsub.f32 0.0, %v84
    %v87 = vmul.f32 %v85, 1.442695
    %v88 = vpow.pop %v87
    %v89 = vmul.f32 %v86, 1.442695
    %v90 = vpow.pop %v89
    %v91 = vmax.f32 %v79, 0.0
    %v92 = vmax.f32 %v80, 0.0
    %v93 = vmul.f32 %v79, %v81
    %v94 = vmul.f32 %v80, %v82
    %v95 = vsub.f32 %v91, %v93
    %v96 = vsub.f32 %v92, %v94
    %v97 = vadd.f32 %v88, 1.0
    %v98 = vlog2.pop %v97
    %v99 = vmul.f32 %v98, 0.6931472
    %v100 = vmul.f32 -0.5, %v88
    %v101 = vadd.f32 %v100, 1.0
    %v102 = vmul.f32 %v101, %v88
    %v103 = vand.u32 2147483647, %v88
    %vm104 = vcmp.lt.f32.partialorder %v103, 0.0004427343
    %v105 = vsel %vm104, %v102, %v99
    %v106 = vadd.f32 %v90, 1.0
    %v107 = vlog2.pop %v106
    %v108 = vmul.f32 %v107, 0.6931472
    %v109 = vmul.f32 -0.5, %v90
    %v110 = vadd.f32 %v109, 1.0
    %v111 = vmul.f32 %v110, %v90
    %v112 = vand.u32 2147483647, %v90
    %vm113 = vcmp.lt.f32.partialorder %v112, 0.0004427343
    %v114 = vsel %vm113, %v111, %v108
    %v115 = vadd.f32 %v95, %v105
    %v116 = vadd.f32 %v96, %v114
    %v117 = vsub.f32 %v93, %v91
    %v118 = vsub.f32 %v94, %v92
    %v119 = vmul.f32 %v117, 1.442695
    %v120 = vpow.pop %v119
    %v121 = vmul.f32 %v118, 1.442695
    %v122 = vpow.pop %v121
    %v123 = vadd.f32 %v88, 1.0
    %v124 = vadd.f32 %v90, 1.0
    %v125 = vrcp.pop %v123
    %v126 = vmul.f32 %v120, %v125
    %v127 = vrcp.pop %v124
    %v128 = vmul.f32 %v122, %v127
    %v129 = vsub.f32 1.0, %v126
    %v130 = vsub.f32 1.0, %v128
    %v131 = vmul.f32 %v129, %v129
    %v132 = vmul.f32 %v130, %v130
    %v133 = vmul.f32 %v131, 0.9
    %v134 = vmul.f32 %v132, 0.9
    %v135 = vmul.f32 %v133, %v115
    %v136 = vmul.f32 %v134, %v116
    %v137 = vld [vmem:[#allocation7] sm:$0xff]
    %v138 = vadd.f32 %v135, %v136
    %v139 = vadd.f32 %v137, %v138
    %140 = vst [vmem:[#allocation7] sm:$0xff] %v139
    // Predicated region
    $region22: #{tpu_custom_call.1} parent=1 // pred_check
      _
    $region23: #{tpu_custom_call.1} parent=1 // pred_check_branch
      %142 = sbr.rel (0) target = $region25
    $region24: #{tpu_custom_call.1} parent=1 // pred_region
      %s144 = ssub.s32 128, 128
      %145 = vsyncadd [#allocation4], %s144
      %s147 = sshll.u32 [#allocation7], 4
      %s148 = int_to_ptr.vmem [resolvable:$true] %s147
      %150 = dma.vmem_to_hbm [thread:$0]  %s148, 128, %s2, [#allocation4]
    $region25: #{tpu_custom_call.1} parent=1 // pred_fallthru
      _
    // Predicated region
    $region26: #{tpu_custom_call.1} parent=1 // pred_check
      _
    $region27: #{tpu_custom_call.1} parent=1 // pred_check_branch
      %152 = sbr.rel (0) target = $region29
    $region28: #{tpu_custom_call.1} parent=1 // pred_region
      %153 = dma.done [#allocation4], 128
    $region29: #{tpu_custom_call.1} parent=1 // pred_fallthru
      _
    %154 = vsyncpa [#allocation3], 1
    %155 = vsyncpa [#allocation6], 1
    %156 = vsyncpa [#allocation4], 1

</llo_original>
